<compile_context>
chip_gen: v7x
topology: tpu7x:2x2x1
jax: 0.10.0
libtpu: 0.0.40
codegen_flags: <defaults>
</compile_context>

<pallas_src>
import jax
import jax.numpy as jnp
from jax import lax
from jax.experimental import pallas as pl
from jax.experimental.pallas import tpu as pltpu

NUM_SCALES = 4
_LANE = 128
_SUBLANE = 8

# dot_general dimension numbers for "A @ B^T": contract lhs dim 1 with rhs dim 1.
_NT_DIMS = (((1,), (1,)), ((), ()))

# Conservative VMEM budget (bytes) for the single-block scheme ("auto" size gate).
_VMEM_BUDGET_BYTES = 24 * 1024 * 1024


def _round_up(x, m):
    return ((x + m - 1) // m) * m


def _fused_downsampler_kernel(*refs):
    """refs = (x_0..x_3, w_0..w_3, y_slab). Single grid step.

    x_i: (NPad_i, KPad_i)   zero-padded (B*L_i, Cin_i) activations (compute dtype)
    w_i: (CoutPad, KPad_i)  zero-padded PyTorch 1x1-conv weights (compute dtype)
    y  : (CoutPad, sum_i NPad_i)  f32 lane-dense packed output slab
    """
    x_refs = refs[:NUM_SCALES]
    w_refs = refs[NUM_SCALES:2 * NUM_SCALES]
    y_ref = refs[2 * NUM_SCALES]
    off = 0
    for x_ref, w_ref in zip(x_refs, w_refs):
        cols = x_ref.shape[0]
        # W_i @ X_i^T -> (CoutPad, NPad_i); static 128-aligned slice -> unmasked stores.
        y_ref[:, off:off + cols] = lax.dot_general(
            w_ref[...],
            x_ref[...],
            _NT_DIMS,
            preferred_element_type=jnp.float32,
        ).astype(y_ref.dtype)
        off += cols


def fused_downsampler(xs, ws, input_res, channels, compute_dtype=jnp.bfloat16):
    """All four 1x1 convs in a single-grid-step pallas_call.

    xs[i]: (B, L_i, Cin_i) activations.
    ws[i]: (Cout_i, Cin_i) conv weights (PyTorch layout, already "transposed").
    Returns list of 4 NCHW tensors (B, Cout_i, H_i, W_i), float32.
    """
    B = xs[0].shape[0]
    cout_pad = _round_up(max(int(w.shape[0]) for w in ws), _SUBLANE)

    x_pads, w_pads, n_pads, n_real = [], [], [], []
    for i in range(NUM_SCALES):
        _, L, Cin = xs[i].shape
        Cout = ws[i].shape[0]
        n = B * L
        n_pad = _round_up(n, _LANE)
        k_pad = _round_up(Cin, _LANE)
        x2d = xs[i].reshape(n, Cin).astype(compute_dtype)          # metadata-only reshape
        x2d = jnp.pad(x2d, ((0, n_pad - n), (0, k_pad - Cin)))     # zero-pad N and K
        w2d = jnp.pad(ws[i].astype(compute_dtype),
                      ((0, cout_pad - Cout), (0, k_pad - Cin)))
        x_pads.append(x2d)
        w_pads.append(w2d)
        n_pads.append(n_pad)
        n_real.append(n)
    total_cols = sum(n_pads)

    in_specs = [pl.BlockSpec(tuple(x.shape), lambda i: (0, 0)) for x in x_pads]
    in_specs += [pl.BlockSpec(tuple(w.shape), lambda i: (0, 0)) for w in w_pads]
    out_spec = pl.BlockSpec((cout_pad, total_cols), lambda i: (0, 0))

    slab = pl.pallas_call(
        _fused_downsampler_kernel,
        out_shape=jax.ShapeDtypeStruct((cout_pad, total_cols), jnp.float32),
        grid_spec=pltpu.PrefetchScalarGridSpec(
            num_scalar_prefetch=0,
            grid=(1,),
            in_specs=in_specs,
            out_specs=out_spec,
        ),
        compiler_params=pltpu.CompilerParams(
            dimension_semantics=("arbitrary",),
        ),
    )(*x_pads, *w_pads)

    results = []
    off = 0
    for i in range(NUM_SCALES):
        H = W = input_res[i]
        Cout = channels[i]
        y = slab[:Cout, off:off + n_real[i]]                 # (Cout, B*L_i)
        y = y.reshape(Cout, B, H, W).transpose(1, 0, 2, 3)   # -> (B, Cout, H, W)
        results.append(y)
        off += n_pads[i]
    return results


def _xla_downsampler(xs, ws, input_res):
    """Plain-XLA fallback (size gate): identical math, no custom-call floor."""
    outs = []
    for i in range(NUM_SCALES):
        B, _, _ = xs[i].shape
        H = W = input_res[i]
        Cout = ws[i].shape[0]
        y = jnp.einsum("blc,oc->bol", xs[i], ws[i])          # (B, Cout, L)
        outs.append(y.reshape(B, Cout, H, W))
    return outs


def _reshape_only(x_blc, input_res):
    """enabled=False path: B L C -> B H W C -> B C H W (no compute)."""
    B, _, Cin = x_blc.shape
    H = W = input_res
    return jnp.transpose(x_blc.reshape(B, H, W, Cin), (0, 3, 1, 2))


def _padded_working_set_bytes(xs, ws, compute_dtype):
    """Rough VMEM working-set estimate for the single-block scheme."""
    B = xs[0].shape[0]
    itemsize = jnp.dtype(compute_dtype).itemsize
    cout_pad = _round_up(max(int(w.shape[0]) for w in ws), _SUBLANE)
    total = 0
    total_cols = 0
    for i in range(NUM_SCALES):
        _, L, Cin = xs[i].shape
        n_pad = _round_up(B * L, _LANE)
        k_pad = _round_up(Cin, _LANE)
        total += n_pad * k_pad * itemsize          # activation block
        total += cout_pad * k_pad * itemsize       # weight block
        total_cols += n_pad
    total += cout_pad * total_cols * 4             # f32 output slab
    return 2 * total                               # headroom for pipeline buffers


class DownsamplerPallas:
    """JAX/Pallas equivalent of models/swin_mtl.py::Downsampler (bias=False)."""

    def __init__(self, dims, channels, input_res, bias=False, enabled=True,
                 key=None, compute_dtype=jnp.bfloat16, use_pallas="auto"):
        assert not bias, "reference module is used with bias=False"
        self.dims = list(dims)
        self.channels = list(channels)
        self.input_res = list(input_res)
        self.enabled = enabled
        self.compute_dtype = compute_dtype
        self.use_pallas = use_pallas
        self.weights = []  # PyTorch layout: (Cout, Cin, 1, 1), float32
        if enabled:
            if key is None:
                key = jax.random.PRNGKey(0)
            keys = jax.random.split(key, NUM_SCALES)
            for i in range(NUM_SCALES):
                fan_in = self.dims[i]
                bound = 1.0 / float(jnp.sqrt(jnp.float32(fan_in)))
                w = jax.random.uniform(
                    keys[i],
                    (self.channels[i], self.dims[i], 1, 1),
                    dtype=jnp.float32,
                    minval=-bound,
                    maxval=bound,
                )
                self.weights.append(w)

    def __call__(self, x):
        if not self.enabled:
            return [_reshape_only(x[i], self.input_res[i]) for i in range(NUM_SCALES)]
        ws = [self.weights[i].reshape(self.channels[i], self.dims[i])
              for i in range(NUM_SCALES)]
        use_pallas = self.use_pallas
        if use_pallas == "auto":
            # TODO(synk): at real Swin dims add an L-tiled grid axis instead of falling
            # back; at very small sizes the XLA path avoids the custom-call floor too.
            use_pallas = (_padded_working_set_bytes(x, ws, self.compute_dtype)
                          <= _VMEM_BUDGET_BYTES)
        if use_pallas:
            return fused_downsampler(x, ws, self.input_res, self.channels,
                                     compute_dtype=self.compute_dtype)
        return _xla_downsampler(x, ws, self.input_res)


def _reference_scale(x_blc, w_conv, input_res):
    """Plain-JAX f32 reference of the PyTorch forward for one scale."""
    B, _, Cin = x_blc.shape
    H = input_res
    Cout = w_conv.shape[0]
    s = jnp.transpose(x_blc.reshape(B, H, H, Cin), (0, 3, 1, 2))  # NCHW
    return jnp.einsum("bchw,oc->bohw", s, w_conv.reshape(Cout, Cin))


if __name__ == "__main__":
    # Small Swin-like pyramid: 4 scales with decreasing resolution / increasing dims.
    B = 2
    input_res = [16, 8, 4, 2]
    dims = [16, 32, 64, 128]
    channels = [8, 8, 8, 8]

    key = jax.random.PRNGKey(0)
    k_in, k_w = jax.random.split(key)
    in_keys = jax.random.split(k_in, NUM_SCALES)
    x = [
        jax.random.normal(
            in_keys[i], (B, input_res[i] * input_res[i], dims[i]), dtype=jnp.float32
        )
        for i in range(NUM_SCALES)
    ]

    model = DownsamplerPallas(
        dims, channels, input_res, bias=False, enabled=True, key=k_w,
        compute_dtype=jnp.bfloat16,  # bf16 operands, f32 accumulate (MXU-native)
        use_pallas=True,             # force the Pallas path so the kernel is exercised
    )
    outs = model(x)
    outs = [jax.block_until_ready(o) for o in outs]

    # Validate shapes + numerics against a plain-JAX f32 reference of the PyTorch
    # forward.  Tolerance loosened for bf16 operands (matmul-only, f32 accumulation).
    ok = True
    for i in range(NUM_SCALES):
        expected_shape = (B, channels[i], input_res[i], input_res[i])
        ref = _reference_scale(x[i], model.weights[i], input_res[i])
        if outs[i].shape != expected_shape:
            ok = False
        if not jnp.allclose(outs[i], ref, atol=5e-2, rtol=5e-2):
            ok = False

    if ok:
        print("KERNEL_OK")
</pallas_src>

<mosaic_0001>
module attributes {stable_mosaic.version = 11 : i64} {
  func.func @_fused_downsampler_kernel(%arg0: i32, %arg1: memref<512x128xbf16, #tpu.memory_space<vmem>>, %arg2: memref<128x128xbf16, #tpu.memory_space<vmem>>, %arg3: memref<128x128xbf16, #tpu.memory_space<vmem>>, %arg4: memref<128x128xbf16, #tpu.memory_space<vmem>>, %arg5: memref<8x128xbf16, #tpu.memory_space<vmem>>, %arg6: memref<8x128xbf16, #tpu.memory_space<vmem>>, %arg7: memref<8x128xbf16, #tpu.memory_space<vmem>>, %arg8: memref<8x128xbf16, #tpu.memory_space<vmem>>, %arg9: memref<8x896xf32, #tpu.memory_space<vmem>>) attributes {dimension_semantics = [#tpu.dimension_semantics<arbitrary>], iteration_bounds = array<i64: 1>, scalar_prefetch = 0 : i64, scratch_operands = 0 : i64, tpu.core_type = #tpu.core_type<tc>, window_params = [{pipeline_mode = #tpu.pipeline_mode<synchronous>, transform_indices = @transform_0, window_bounds = array<i64: 512, 128>}, {pipeline_mode = #tpu.pipeline_mode<synchronous>, transform_indices = @transform_1, window_bounds = array<i64: 128, 128>}, {pipeline_mode = #tpu.pipeline_mode<synchronous>, transform_indices = @transform_2, window_bounds = array<i64: 128, 128>}, {pipeline_mode = #tpu.pipeline_mode<synchronous>, transform_indices = @transform_3, window_bounds = array<i64: 128, 128>}, {pipeline_mode = #tpu.pipeline_mode<synchronous>, transform_indices = @transform_4, window_bounds = array<i64: 8, 128>}, {pipeline_mode = #tpu.pipeline_mode<synchronous>, transform_indices = @transform_5, window_bounds = array<i64: 8, 128>}, {pipeline_mode = #tpu.pipeline_mode<synchronous>, transform_indices = @transform_6, window_bounds = array<i64: 8, 128>}, {pipeline_mode = #tpu.pipeline_mode<synchronous>, transform_indices = @transform_7, window_bounds = array<i64: 8, 128>}, {pipeline_mode = #tpu.pipeline_mode<synchronous>, transform_indices = @transform_8, window_bounds = array<i64: 8, 896>}]} {
    %c0 = arith.constant 0 : index
    %c0_0 = arith.constant 0 : index
    %0 = vector.load %arg5[%c0, %c0_0] : memref<8x128xbf16, #tpu.memory_space<vmem>>, vector<8x128xbf16>
    %c0_1 = arith.constant 0 : index
    %c0_2 = arith.constant 0 : index
    %1 = vector.load %arg1[%c0_1, %c0_2] : memref<512x128xbf16, #tpu.memory_space<vmem>>, vector<512x128xbf16>
    %cst = arith.constant dense<0.000000e+00> : vector<8x512xf32>
    %2 = tpu.matmul %0, %1, %cst {dimension_numbers = #tpu.dot_dimension_numbers<[1], [1], [0], [0], [0, 0, 1, 0], [], []>} : vector<8x128xbf16>, vector<512x128xbf16>, vector<8x512xf32> -> vector<8x512xf32>
    %c0_3 = arith.constant 0 : index
    %c0_4 = arith.constant 0 : index
    %3 = vector.load %arg9[%c0_3, %c0_4] : memref<8x896xf32, #tpu.memory_space<vmem>>, vector<8x512xf32>
    tpu.vector_store %arg9[%c0_3, %c0_4], %2 {strides = array<i32>} : memref<8x896xf32, #tpu.memory_space<vmem>>, vector<8x512xf32>,
    %c0_5 = arith.constant 0 : index
    %c0_6 = arith.constant 0 : index
    %4 = vector.load %arg6[%c0_5, %c0_6] : memref<8x128xbf16, #tpu.memory_space<vmem>>, vector<8x128xbf16>
    %c0_7 = arith.constant 0 : index
    %c0_8 = arith.constant 0 : index
    %5 = vector.load %arg2[%c0_7, %c0_8] : memref<128x128xbf16, #tpu.memory_space<vmem>>, vector<128x128xbf16>
    %cst_9 = arith.constant dense<0.000000e+00> : vector<8x128xf32>
    %6 = tpu.matmul %4, %5, %cst_9 {dimension_numbers = #tpu.dot_dimension_numbers<[1], [1], [0], [0], [0, 0, 1, 0], [], []>} : vector<8x128xbf16>, vector<128x128xbf16>, vector<8x128xf32> -> vector<8x128xf32>
    %c0_10 = arith.constant 0 : index
    %c512 = arith.constant 512 : index
    %7 = vector.load %arg9[%c0_10, %c512] : memref<8x896xf32, #tpu.memory_space<vmem>>, vector<8x128xf32>
    tpu.vector_store %arg9[%c0_10, %c512], %6 {strides = array<i32>} : memref<8x896xf32, #tpu.memory_space<vmem>>, vector<8x128xf32>,
    %c0_11 = arith.constant 0 : index
    %c0_12 = arith.constant 0 : index
    %8 = vector.load %arg7[%c0_11, %c0_12] : memref<8x128xbf16, #tpu.memory_space<vmem>>, vector<8x128xbf16>
    %c0_13 = arith.constant 0 : index
    %c0_14 = arith.constant 0 : index
    %9 = vector.load %arg3[%c0_13, %c0_14] : memref<128x128xbf16, #tpu.memory_space<vmem>>, vector<128x128xbf16>
    %cst_15 = arith.constant dense<0.000000e+00> : vector<8x128xf32>
    %10 = tpu.matmul %8, %9, %cst_15 {dimension_numbers = #tpu.dot_dimension_numbers<[1], [1], [0], [0], [0, 0, 1, 0], [], []>} : vector<8x128xbf16>, vector<128x128xbf16>, vector<8x128xf32> -> vector<8x128xf32>
    %c0_16 = arith.constant 0 : index
    %c640 = arith.constant 640 : index
    %11 = vector.load %arg9[%c0_16, %c640] : memref<8x896xf32, #tpu.memory_space<vmem>>, vector<8x128xf32>
    tpu.vector_store %arg9[%c0_16, %c640], %10 {strides = array<i32>} : memref<8x896xf32, #tpu.memory_space<vmem>>, vector<8x128xf32>,
    %c0_17 = arith.constant 0 : index
    %c0_18 = arith.constant 0 : index
    %12 = vector.load %arg8[%c0_17, %c0_18] : memref<8x128xbf16, #tpu.memory_space<vmem>>, vector<8x128xbf16>
    %c0_19 = arith.constant 0 : index
    %c0_20 = arith.constant 0 : index
    %13 = vector.load %arg4[%c0_19, %c0_20] : memref<128x128xbf16, #tpu.memory_space<vmem>>, vector<128x128xbf16>
    %cst_21 = arith.constant dense<0.000000e+00> : vector<8x128xf32>
    %14 = tpu.matmul %12, %13, %cst_21 {dimension_numbers = #tpu.dot_dimension_numbers<[1], [1], [0], [0], [0, 0, 1, 0], [], []>} : vector<8x128xbf16>, vector<128x128xbf16>, vector<8x128xf32> -> vector<8x128xf32>
    %c0_22 = arith.constant 0 : index
    %c768 = arith.constant 768 : index
    %15 = vector.load %arg9[%c0_22, %c768] : memref<8x896xf32, #tpu.memory_space<vmem>>, vector<8x128xf32>
    tpu.vector_store %arg9[%c0_22, %c768], %14 {strides = array<i32>} : memref<8x896xf32, #tpu.memory_space<vmem>>, vector<8x128xf32>,
    return
  }
  func.func @transform_0(%arg0: i32) -> (i32, i32) {
    %c0_i32 = arith.constant 0 : i32
    %c0_i32_0 = arith.constant 0 : i32
    %c0_i32_1 = arith.constant 0 : i32
    return %c0_i32, %c0_i32_0 : i32, i32
  }
  func.func @transform_1(%arg0: i32) -> (i32, i32) {
    %c0_i32 = arith.constant 0 : i32
    %c0_i32_0 = arith.constant 0 : i32
    %c0_i32_1 = arith.constant 0 : i32
    return %c0_i32, %c0_i32_0 : i32, i32
  }
  func.func @transform_2(%arg0: i32) -> (i32, i32) {
    %c0_i32 = arith.constant 0 : i32
    %c0_i32_0 = arith.constant 0 : i32
    %c0_i32_1 = arith.constant 0 : i32
    return %c0_i32, %c0_i32_0 : i32, i32
  }
  func.func @transform_3(%arg0: i32) -> (i32, i32) {
    %c0_i32 = arith.constant 0 : i32
    %c0_i32_0 = arith.constant 0 : i32
    %c0_i32_1 = arith.constant 0 : i32
    return %c0_i32, %c0_i32_0 : i32, i32
  }
  func.func @transform_4(%arg0: i32) -> (i32, i32) {
    %c0_i32 = arith.constant 0 : i32
    %c0_i32_0 = arith.constant 0 : i32
    %c0_i32_1 = arith.constant 0 : i32
    return %c0_i32, %c0_i32_0 : i32, i32
  }
  func.func @transform_5(%arg0: i32) -> (i32, i32) {
    %c0_i32 = arith.constant 0 : i32
    %c0_i32_0 = arith.constant 0 : i32
    %c0_i32_1 = arith.constant 0 : i32
    return %c0_i32, %c0_i32_0 : i32, i32
  }
  func.func @transform_6(%arg0: i32) -> (i32, i32) {
    %c0_i32 = arith.constant 0 : i32
    %c0_i32_0 = arith.constant 0 : i32
    %c0_i32_1 = arith.constant 0 : i32
    return %c0_i32, %c0_i32_0 : i32, i32
  }
  func.func @transform_7(%arg0: i32) -> (i32, i32) {
    %c0_i32 = arith.constant 0 : i32
    %c0_i32_0 = arith.constant 0 : i32
    %c0_i32_1 = arith.constant 0 : i32
    return %c0_i32, %c0_i32_0 : i32, i32
  }
  func.func @transform_8(%arg0: i32) -> (i32, i32) {
    %c0_i32 = arith.constant 0 : i32
    %c0_i32_0 = arith.constant 0 : i32
    %c0_i32_1 = arith.constant 0 : i32
    return %c0_i32, %c0_i32_0 : i32, i32
  }
}

</mosaic_0001>

<llo_original>
// kernel: tpu_custom_call.1
$region0: #{tpu_custom_call.1}
  #allocation0 [shape = 'u32[]', space=smem, size = 0x4, offset = 0x4, fixed_abs, tag = 'smem constant byte address 0x4 - core index']
  #allocation1 [shape = 'u32[144,128]{1,0:T(1,128)}', space=vmem, size = 0x12000, scoped, tag = 'internal scratch']
  %s0 = inlined_call_operand.hbm [shape: bf16[512,128], index: 0, kind: input, shape index: {}]
  %s1 = inlined_call_operand.hbm [shape: bf16[128,128], index: 1, kind: input, shape index: {}]
  %s2 = inlined_call_operand.hbm [shape: bf16[128,128], index: 2, kind: input, shape index: {}]
  %s3 = inlined_call_operand.hbm [shape: bf16[128,128], index: 3, kind: input, shape index: {}]
  %s4 = inlined_call_operand.vmem [shape: bf16[8,128], index: 4, kind: input, shape index: {}]
  %s5 = inlined_call_operand.vmem [shape: bf16[8,128], index: 5, kind: input, shape index: {}]
  %s6 = inlined_call_operand.vmem [shape: bf16[8,128], index: 6, kind: input, shape index: {}]
  %s7 = inlined_call_operand.vmem [shape: bf16[8,128], index: 7, kind: input, shape index: {}]
  %s8 = inlined_call_operand.hbm [shape: f32[8,896], index: 8, kind: output, shape index: {}]
  %s9 = sld [smem:[#allocation0]]
  $region58: #{tpu_custom_call.1} parent=0
    _
  %s11 = ssub.s32 1, %s9
  %s12 = scalar_select 0, %s11, %s9
  $region1: #{tpu_custom_call.1} parent=0
    #allocation2 [shape = 'u8[131072]{0}', space=vmem, size = 0x20000, scoped, tag = 'input window, operand 0, single buffered']
    #allocation3 [shape = 's32[1]{0}', space=sflag, size = 0x4, scoped, tag = 'scoped memory for tpu_custom_call.1']
    #allocation4 [shape = 's32[1]{0}', space=sflag, size = 0x4, scoped, tag = 'scoped memory for tpu_custom_call.1']
    #allocation5 [shape = 'u8[32768]{0}', space=vmem, size = 0x8000, scoped, tag = 'input window, operand 1, single buffered']
    #allocation6 [shape = 's32[1]{0}', space=sflag, size = 0x4, scoped, tag = 'scoped memory for tpu_custom_call.1']
    #allocation7 [shape = 'u8[32768]{0}', space=vmem, size = 0x8000, scoped, tag = 'input window, operand 2, single buffered']
    #allocation8 [shape = 'u8[32768]{0}', space=vmem, size = 0x8000, scoped, tag = 'input window, operand 3, single buffered']
    #allocation9 [shape = 's32[1]{0}', space=sflag, size = 0x4, scoped, tag = 'scoped memory for tpu_custom_call.1']
    #allocation10 [shape = 'u8[28672]{0}', space=vmem, size = 0x7000, scoped, tag = 'output window, operand 0, single buffered']
    %13 = vsyncpa [#allocation3], 0
    %14 = vsyncpa [#allocation6], 0
    %15 = vsyncpa [#allocation9], 0
    %16 = vsyncpa [#allocation4], 0
    // Predicated region
    $region2: #{tpu_custom_call.1} parent=1 // pred_check
      _
    $region3: #{tpu_custom_call.1} parent=1 // pred_check_branch
      %18 = sbr.rel (0) target = $region5
    $region4: #{tpu_custom_call.1} parent=1 // pred_region
      %s20 = ssub.s32 4096, 4096
      %21 = vsyncadd [#allocation3], %s20
      %s22 = sshll.u32 [#allocation2], 4
      %s23 = int_to_ptr.vmem [resolvable:$true] %s22
      %28 = dma.hbm_to_vmem [thread:$0]  %s0, 4096, %s23, [#allocation3], 64, 64, 4
    $region5: #{tpu_custom_call.1} parent=1 // pred_fallthru
      _
    // Predicated region
    $region6: #{tpu_custom_call.1} parent=1 // pred_check
      _
    $region7: #{tpu_custom_call.1} parent=1 // pred_check_branch
      %30 = sbr.rel (0) target = $region9
    $region8: #{tpu_custom_call.1} parent=1 // pred_region
      %s32 = ssub.s32 1024, 1024
      %33 = vsyncadd [#allocation6], %s32
      %s34 = sshll.u32 [#allocation5], 4
      %s35 = int_to_ptr.vmem [resolvable:$true] %s34
      %40 = dma.hbm_to_vmem [thread:$0]  %s1, 1024, %s35, [#allocation6], 64, 64, 4
    $region9: #{tpu_custom_call.1} parent=1 // pred_fallthru
      _
    // Predicated region
    $region10: #{tpu_custom_call.1} parent=1 // pred_check
      _
    $region11: #{tpu_custom_call.1} parent=1 // pred_check_branch
      %42 = sbr.rel (0) target = $region13
    $region12: #{tpu_custom_call.1} parent=1 // pred_region
      %s44 = ssub.s32 1024, 1024
      %45 = vsyncadd [#allocation6], %s44
      %s46 = sshll.u32 [#allocation7], 4
      %s47 = int_to_ptr.vmem [resolvable:$true] %s46
      %52 = dma.hbm_to_vmem [thread:$0]  %s2, 1024, %s47, [#allocation6], 64, 64, 4
    $region13: #{tpu_custom_call.1} parent=1 // pred_fallthru
      _
    // Predicated region
    $region14: #{tpu_custom_call.1} parent=1 // pred_check
      _
    $region15: #{tpu_custom_call.1} parent=1 // pred_check_branch
      %54 = sbr.rel (0) target = $region17
    $region16: #{tpu_custom_call.1} parent=1 // pred_region
      %s56 = ssub.s32 1024, 1024
      %57 = vsyncadd [#allocation9], %s56
      %s58 = sshll.u32 [#allocation8], 4
      %s59 = int_to_ptr.vmem [resolvable:$true] %s58
      %64 = dma.hbm_to_vmem [thread:$0]  %s3, 1024, %s59, [#allocation9], 64, 64, 4
    $region17: #{tpu_custom_call.1} parent=1 // pred_fallthru
      _
    // Predicated region
    $region18: #{tpu_custom_call.1} parent=1 // pred_check
      _
    $region19: #{tpu_custom_call.1} parent=1 // pred_check_branch
      %66 = sbr.rel (0) target = $region21
    $region20: #{tpu_custom_call.1} parent=1 // pred_region
      _
    $region21: #{tpu_custom_call.1} parent=1 // pred_fallthru
      _
    // Predicated region
    $region22: #{tpu_custom_call.1} parent=1 // pred_check
      _
    $region23: #{tpu_custom_call.1} parent=1 // pred_check_branch
      %68 = sbr.rel (0) target = $region25
    $region24: #{tpu_custom_call.1} parent=1 // pred_region
      _
    $region25: #{tpu_custom_call.1} parent=1 // pred_fallthru
      _
    // Predicated region
    $region26: #{tpu_custom_call.1} parent=1 // pred_check
      _
    $region27: #{tpu_custom_call.1} parent=1 // pred_check_branch
      %70 = sbr.rel (0) target = $region29
    $region28: #{tpu_custom_call.1} parent=1 // pred_region
      _
    $region29: #{tpu_custom_call.1} parent=1 // pred_fallthru
      _
    // Predicated region
    $region30: #{tpu_custom_call.1} parent=1 // pred_check
      _
    $region31: #{tpu_custom_call.1} parent=1 // pred_check_branch
      %72 = sbr.rel (0) target = $region33
    $region32: #{tpu_custom_call.1} parent=1 // pred_region
      _
    $region33: #{tpu_custom_call.1} parent=1 // pred_fallthru
      _
    // Predicated region
    $region34: #{tpu_custom_call.1} parent=1 // pred_check
      _
    $region35: #{tpu_custom_call.1} parent=1 // pred_check_branch
      %74 = sbr.rel (0) target = $region37
    $region36: #{tpu_custom_call.1} parent=1 // pred_region
      %75 = dma.done [#allocation3], 4096
    $region37: #{tpu_custom_call.1} parent=1 // pred_fallthru
      _
    // Predicated region
    $region38: #{tpu_custom_call.1} parent=1 // pred_check
      _
    $region39: #{tpu_custom_call.1} parent=1 // pred_check_branch
      %77 = sbr.rel (0) target = $region41
    $region40: #{tpu_custom_call.1} parent=1 // pred_region
      %78 = dma.done [#allocation6], 1024
    $region41: #{tpu_custom_call.1} parent=1 // pred_fallthru
      _
    // Predicated region
    $region42: #{tpu_custom_call.1} parent=1 // pred_check
      _
    $region43: #{tpu_custom_call.1} parent=1 // pred_check_branch
      %80 = sbr.rel (0) target = $region45
    $region44: #{tpu_custom_call.1} parent=1 // pred_region
      %81 = dma.done [#allocation6], 1024
    $region45: #{tpu_custom_call.1} parent=1 // pred_fallthru
      _
    // Predicated region
    $region46: #{tpu_custom_call.1} parent=1 // pred_check
      _
    $region47: #{tpu_custom_call.1} parent=1 // pred_check_branch
      %83 = sbr.rel (0) target = $region49
    $region48: #{tpu_custom_call.1} parent=1 // pred_region
      %84 = dma.done [#allocation9], 1024
    $region49: #{tpu_custom_call.1} parent=1 // pred_fallthru
      _
    %v86 = vld [vmem:[%s4] sm:$0xf]
    %v87 = vld [vmem:[#allocation2] sm:$0xf]
    %v88 = vld [vmem:[#allocation2 + $0x4] sm:$0xf]
    %v89 = vld [vmem:[#allocation2 + $0x8] sm:$0xf]
    %v90 = vld [vmem:[#allocation2 + $0xc] sm:$0xf]
    %v91 = vld [vmem:[#allocation2 + $0x10] sm:$0xf]
    %v92 = vld [vmem:[#allocation2 + $0x14] sm:$0xf]
    %v93 = vld [vmem:[#allocation2 + $0x18] sm:$0xf]
    %v94 = vld [vmem:[#allocation2 + $0x1c] sm:$0xf]
    %v95 = vld [vmem:[#allocation2 + $0x20] sm:$0xf]
    %v96 = vld [vmem:[#allocation2 + $0x24] sm:$0xf]
    %v97 = vld [vmem:[#allocation2 + $0x28] sm:$0xf]
    %v98 = vld [vmem:[#allocation2 + $0x2c] sm:$0xf]
    %v99 = vld [vmem:[#allocation2 + $0x30] sm:$0xf]
    %v100 = vld [vmem:[#allocation2 + $0x34] sm:$0xf]
    %v101 = vld [vmem:[#allocation2 + $0x38] sm:$0xf]
    %v102 = vld [vmem:[#allocation2 + $0x3c] sm:$0xf]
    %v103 = vld [vmem:[#allocation2 + $0x40] sm:$0xf]
    %v104 = vld [vmem:[#allocation2 + $0x44] sm:$0xf]
    %v105 = vld [vmem:[#allocation2 + $0x48] sm:$0xf]
    %v106 = vld [vmem:[#allocation2 + $0x4c] sm:$0xf]
    %v107 = vld [vmem:[#allocation2 + $0x50] sm:$0xf]
    %v108 = vld [vmem:[#allocation2 + $0x54] sm:$0xf]
    %v109 = vld [vmem:[#allocation2 + $0x58] sm:$0xf]
    %v110 = vld [vmem:[#allocation2 + $0x5c] sm:$0xf]
    %v111 = vld [vmem:[#allocation2 + $0x60] sm:$0xf]
    %v112 = vld [vmem:[#allocation2 + $0x64] sm:$0xf]
    %v113 = vld [vmem:[#allocation2 + $0x68] sm:$0xf]
    %v114 = vld [vmem:[#allocation2 + $0x6c] sm:$0xf]
    %v115 = vld [vmem:[#allocation2 + $0x70] sm:$0xf]
    %v116 = vld [vmem:[#allocation2 + $0x74] sm:$0xf]
    %v117 = vld [vmem:[#allocation2 + $0x78] sm:$0xf]
    %v118 = vld [vmem:[#allocation2 + $0x7c] sm:$0xf]
    %v119 = vld [vmem:[#allocation2 + $0x80] sm:$0xf]
    %v120 = vld [vmem:[#allocation2 + $0x84] sm:$0xf]
    %v121 = vld [vmem:[#allocation2 + $0x88] sm:$0xf]
    %v122 = vld [vmem:[#allocation2 + $0x8c] sm:$0xf]
    %v123 = vld [vmem:[#allocation2 + $0x90] sm:$0xf]
    %v124 = vld [vmem:[#allocation2 + $0x94] sm:$0xf]
    %v125 = vld [vmem:[#allocation2 + $0x98] sm:$0xf]
    %v126 = vld [vmem:[#allocation2 + $0x9c] sm:$0xf]
    %v127 = vld [vmem:[#allocation2 + $0xa0] sm:$0xf]
    %v128 = vld [vmem:[#allocation2 + $0xa4] sm:$0xf]
    %v129 = vld [vmem:[#allocation2 + $0xa8] sm:$0xf]
    %v130 = vld [vmem:[#allocation2 + $0xac] sm:$0xf]
    %v131 = vld [vmem:[#allocation2 + $0xb0] sm:$0xf]
    %v132 = vld [vmem:[#allocation2 + $0xb4] sm:$0xf]
    %v133 = vld [vmem:[#allocation2 + $0xb8] sm:$0xf]
    %v134 = vld [vmem:[#allocation2 + $0xbc] sm:$0xf]
    %v135 = vld [vmem:[#allocation2 + $0xc0] sm:$0xf]
    %v136 = vld [vmem:[#allocation2 + $0xc4] sm:$0xf]
    %v137 = vld [vmem:[#allocation2 + $0xc8] sm:$0xf]
    %v138 = vld [vmem:[#allocation2 + $0xcc] sm:$0xf]
    %v139 = vld [vmem:[#allocation2 + $0xd0] sm:$0xf]
    %v140 = vld [vmem:[#allocation2 + $0xd4] sm:$0xf]
    %v141 = vld [vmem:[#allocation2 + $0xd8] sm:$0xf]
    %v142 = vld [vmem:[#allocation2 + $0xdc] sm:$0xf]
    %v143 = vld [vmem:[#allocation2 + $0xe0] sm:$0xf]
    %v144 = vld [vmem:[#allocation2 + $0xe4] sm:$0xf]
    %v145 = vld [vmem:[#allocation2 + $0xe8] sm:$0xf]
    %v146 = vld [vmem:[#allocation2 + $0xec] sm:$0xf]
    %v147 = vld [vmem:[#allocation2 + $0xf0] sm:$0xf]
    %v148 = vld [vmem:[#allocation2 + $0xf4] sm:$0xf]
    %v149 = vld [vmem:[#allocation2 + $0xf8] sm:$0xf]
    %v150 = vld [vmem:[#allocation2 + $0xfc] sm:$0xf]
    %v215 = vunpack.c.l.b16 %v87
    %v216 = vunpack.c.l.b16 %v88
    %v217 = vunpack.c.l.b16 %v89
    %v218 = vunpack.c.l.b16 %v90
    %v219 = vunpack.c.l.b16 %v91
    %v220 = vunpack.c.l.b16 %v92
    %v221 = vunpack.c.l.b16 %v93
    %v222 = vunpack.c.l.b16 %v94
    %v223 = vunpack.c.l.b16 %v95
    %v224 = vunpack.c.l.b16 %v96
    %v225 = vunpack.c.l.b16 %v97
    %v226 = vunpack.c.l.b16 %v98
    %v227 = vunpack.c.l.b16 %v99
    %v228 = vunpack.c.l.b16 %v100
    %v229 = vunpack.c.l.b16 %v101
    %v230 = vunpack.c.l.b16 %v102
    %v231 = vunpack.c.l.b16 %v103
    %v232 = vunpack.c.l.b16 %v104
    %v233 = vunpack.c.l.b16 %v105
    %v234 = vunpack.c.l.b16 %v106
    %v235 = vunpack.c.l.b16 %v107
    %v236 = vunpack.c.l.b16 %v108
    %v237 = vunpack.c.l.b16 %v109
    %v238 = vunpack.c.l.b16 %v110
    %v239 = vunpack.c.l.b16 %v111
    %v240 = vunpack.c.l.b16 %v112
    %v241 = vunpack.c.l.b16 %v113
    %v242 = vunpack.c.l.b16 %v114
    %v243 = vunpack.c.l.b16 %v115
    %v244 = vunpack.c.l.b16 %v116
    %v245 = vunpack.c.l.b16 %v117
    %v246 = vunpack.c.l.b16 %v118
    %v247 = vunpack.c.l.b16 %v119
    %v248 = vunpack.c.l.b16 %v120
    %v249 = vunpack.c.l.b16 %v121
    %v250 = vunpack.c.l.b16 %v122
    %v251 = vunpack.c.l.b16 %v123
    %v252 = vunpack.c.l.b16 %v124
    %v253 = vunpack.c.l.b16 %v125
    %v254 = vunpack.c.l.b16 %v126
    %v255 = vunpack.c.l.b16 %v127
    %v256 = vunpack.c.l.b16 %v128
    %v257 = vunpack.c.l.b16 %v129
    %v258 = vunpack.c.l.b16 %v130
    %v259 = vunpack.c.l.b16 %v131
    %v260 = vunpack.c.l.b16 %v132
    %v261 = vunpack.c.l.b16 %v133
    %v262 = vunpack.c.l.b16 %v134
    %v263 = vunpack.c.l.b16 %v135
    %v264 = vunpack.c.l.b16 %v136
    %v265 = vunpack.c.l.b16 %v137
    %v266 = vunpack.c.l.b16 %v138
    %v267 = vunpack.c.l.b16 %v139
    %v268 = vunpack.c.l.b16 %v140
    %v269 = vunpack.c.l.b16 %v141
    %v270 = vunpack.c.l.b16 %v142
    %v271 = vunpack.c.l.b16 %v143
    %v272 = vunpack.c.l.b16 %v144
    %v273 = vunpack.c.l.b16 %v145
    %v274 = vunpack.c.l.b16 %v146
    %v275 = vunpack.c.l.b16 %v147
    %v276 = vunpack.c.l.b16 %v148
    %v277 = vunpack.c.l.b16 %v149
    %v278 = vunpack.c.l.b16 %v150
    %v279 = vpack.c.b16 %v216, %v215
    %v280 = vpack.c.b16 %v218, %v217
    %v281 = vpack.c.b16 %v220, %v219
    %v282 = vpack.c.b16 %v222, %v221
    %v283 = vpack.c.b16 %v224, %v223
    %v284 = vpack.c.b16 %v226, %v225
    %v285 = vpack.c.b16 %v228, %v227
    %v286 = vpack.c.b16 %v230, %v229
    %v287 = vpack.c.b16 %v232, %v231
    %v288 = vpack.c.b16 %v234, %v233
    %v289 = vpack.c.b16 %v236, %v235
    %v290 = vpack.c.b16 %v238, %v237
    %v291 = vpack.c.b16 %v240, %v239
    %v292 = vpack.c.b16 %v242, %v241
    %v293 = vpack.c.b16 %v244, %v243
    %v294 = vpack.c.b16 %v246, %v245
    %v295 = vpack.c.b16 %v248, %v247
    %v296 = vpack.c.b16 %v250, %v249
    %v297 = vpack.c.b16 %v252, %v251
    %v298 = vpack.c.b16 %v254, %v253
    %v299 = vpack.c.b16 %v256, %v255
    %v300 = vpack.c.b16 %v258, %v257
    %v301 = vpack.c.b16 %v260, %v259
    %v302 = vpack.c.b16 %v262, %v261
    %v303 = vpack.c.b16 %v264, %v263
    %v304 = vpack.c.b16 %v266, %v265
    %v305 = vpack.c.b16 %v268, %v267
    %v306 = vpack.c.b16 %v270, %v269
    %v307 = vpack.c.b16 %v272, %v271
    %v308 = vpack.c.b16 %v274, %v273
    %v309 = vpack.c.b16 %v276, %v275
    %v310 = vpack.c.b16 %v278, %v277
    %343 = vmatprep.subr.bf16.mxu0 0
    %344 = vmatpush1.bf16.xpose.msra.mxu0 %v279
    %345 = vmatprep.subr.bf16.mxu0 0
    %346 = vmatpush1.bf16.xpose.msra.mxu0 %v280
    %347 = vmatprep.subr.bf16.mxu0 0
    %348 = vmatpush1.bf16.xpose.msra.mxu0 %v281
    %349 = vmatprep.subr.bf16.mxu0 0
    %350 = vmatpush1.bf16.xpose.msra.mxu0 %v282
    %351 = vmatprep.subr.bf16.mxu0 0
    %352 = vmatpush1.bf16.xpose.msra.mxu0 %v283
    %353 = vmatprep.subr.bf16.mxu0 0
    %354 = vmatpush1.bf16.xpose.msra.mxu0 %v284
    %355 = vmatprep.subr.bf16.mxu0 0
    %356 = vmatpush1.bf16.xpose.msra.mxu0 %v285
    %357 = vmatprep.subr.bf16.mxu0 0
    %358 = vmatpush1.bf16.xpose.msra.mxu0 %v286
    %359 = vmatprep.subr.bf16.mxu0 0
    %360 = vmatpush1.bf16.xpose.msra.mxu0 %v287
    %361 = vmatprep.subr.bf16.mxu0 0
    %362 = vmatpush1.bf16.xpose.msra.mxu0 %v288
    %363 = vmatprep.subr.bf16.mxu0 0
    %364 = vmatpush1.bf16.xpose.msra.mxu0 %v289
    %365 = vmatprep.subr.bf16.mxu0 0
    %366 = vmatpush1.bf16.xpose.msra.mxu0 %v290
    %367 = vmatprep.subr.bf16.mxu0 0
    %368 = vmatpush1.bf16.xpose.msra.mxu0 %v291
    %369 = vmatprep.subr.bf16.mxu0 0
    %370 = vmatpush1.bf16.xpose.msra.mxu0 %v292
    %371 = vmatprep.subr.bf16.mxu0 0
    %372 = vmatpush1.bf16.xpose.msra.mxu0 %v293
    %373 = vmatprep.subr.bf16.mxu0 0
    %374 = vmatpush1.bf16.xpose.msra.mxu0 %v294
    %375 = vmatprep.mubr.bf16.mxu0 0
    %376 = vmatmul.mubr.bf16.gmra.mrb[0].mxu0 %v86
    %v377 = vpop.f32.mrb[0].mxu0
    %v378 = vadd.f32 0.0, %v377
    %v379 = vpop.f32.mrb[0].mxu0
    %v380 = vadd.f32 0.0, %v379
    %v381 = vpop.f32.mrb[0].mxu0
    %v382 = vpop.f32.mrb[0].mxu0
    %383 = vdwg.mxu0
    %384 = vmatprep.subr.bf16.mxu0 0
    %385 = vmatpush1.bf16.xpose.msra.mxu0 %v295
    %386 = vmatprep.subr.bf16.mxu0 0
    %387 = vmatpush1.bf16.xpose.msra.mxu0 %v296
    %388 = vmatprep.subr.bf16.mxu0 0
    %389 = vmatpush1.bf16.xpose.msra.mxu0 %v297
    %390 = vmatprep.subr.bf16.mxu0 0
    %391 = vmatpush1.bf16.xpose.msra.mxu0 %v298
    %392 = vmatprep.subr.bf16.mxu0 0
    %393 = vmatpush1.bf16.xpose.msra.mxu0 %v299
    %394 = vmatprep.subr.bf16.mxu0 0
    %395 = vmatpush1.bf16.xpose.msra.mxu0 %v300
    %396 = vmatprep.subr.bf16.mxu0 0
    %397 = vmatpush1.bf16.xpose.msra.mxu0 %v301
    %398 = vmatprep.subr.bf16.mxu0 0
    %399 = vmatpush1.bf16.xpose.msra.mxu0 %v302
    %400 = vmatprep.subr.bf16.mxu0 0
    %401 = vmatpush1.bf16.xpose.msra.mxu0 %v303
    %402 = vmatprep.subr.bf16.mxu0 0
    %403 = vmatpush1.bf16.xpose.msra.mxu0 %v304
    %404 = vmatprep.subr.bf16.mxu0 0
    %405 = vmatpush1.bf16.xpose.msra.mxu0 %v305
    %406 = vmatprep.subr.bf16.mxu0 0
    %407 = vmatpush1.bf16.xpose.msra.mxu0 %v306
    %408 = vmatprep.subr.bf16.mxu0 0
    %409 = vmatpush1.bf16.xpose.msra.mxu0 %v307
    %410 = vmatprep.subr.bf16.mxu0 0
    %411 = vmatpush1.bf16.xpose.msra.mxu0 %v308
    %412 = vmatprep.subr.bf16.mxu0 0
    %413 = vmatpush1.bf16.xpose.msra.mxu0 %v309
    %414 = vmatprep.subr.bf16.mxu0 0
    %415 = vmatpush1.bf16.xpose.msra.mxu0 %v310
    %416 = vmatprep.mubr.bf16.mxu0 0
    %417 = vmatmul.mubr.bf16.gmra.mrb[0].mxu0 %v86
    %v418 = vpop.f32.mrb[0].mxu0
    %v419 = vadd.f32 0.0, %v418
    %v420 = vpop.f32.mrb[0].mxu0
    %v421 = vadd.f32 0.0, %v420
    %v422 = vpop.f32.mrb[0].mxu0
    %v423 = vpop.f32.mrb[0].mxu0
    %424 = vdwg.mxu0
    %425 = vst [vmem:[#allocation10] sm:$0xff] %v378
    %426 = vst [vmem:[#allocation10 + $0x8] sm:$0xff] %v380
    %427 = vst [vmem:[#allocation10 + $0x10] sm:$0xff] %v419
    %428 = vst [vmem:[#allocation10 + $0x18] sm:$0xff] %v421
    %v429 = vld [vmem:[%s5] sm:$0xf]
    %v430 = vld [vmem:[#allocation5] sm:$0xf]
    %v431 = vld [vmem:[#allocation5 + $0x4] sm:$0xf]
    %v432 = vld [vmem:[#allocation5 + $0x8] sm:$0xf]
    %v433 = vld [vmem:[#allocation5 + $0xc] sm:$0xf]
    %v434 = vld [vmem:[#allocation5 + $0x10] sm:$0xf]
    %v435 = vld [vmem:[#allocation5 + $0x14] sm:$0xf]
    %v436 = vld [vmem:[#allocation5 + $0x18] sm:$0xf]
    %v437 = vld [vmem:[#allocation5 + $0x1c] sm:$0xf]
    %v438 = vld [vmem:[#allocation5 + $0x20] sm:$0xf]
    %v439 = vld [vmem:[#allocation5 + $0x24] sm:$0xf]
    %v440 = vld [vmem:[#allocation5 + $0x28] sm:$0xf]
    %v441 = vld [vmem:[#allocation5 + $0x2c] sm:$0xf]
    %v442 = vld [vmem:[#allocation5 + $0x30] sm:$0xf]
    %v443 = vld [vmem:[#allocation5 + $0x34] sm:$0xf]
    %v444 = vld [vmem:[#allocation5 + $0x38] sm:$0xf]
    %v445 = vld [vmem:[#allocation5 + $0x3c] sm:$0xf]
    %v462 = vunpack.c.l.b16 %v430
    %v463 = vunpack.c.l.b16 %v431
    %v464 = vunpack.c.l.b16 %v432
    %v465 = vunpack.c.l.b16 %v433
    %v466 = vunpack.c.l.b16 %v434
    %v467 = vunpack.c.l.b16 %v435
    %v468 = vunpack.c.l.b16 %v436
    %v469 = vunpack.c.l.b16 %v437
    %v470 = vunpack.c.l.b16 %v438
    %v471 = vunpack.c.l.b16 %v439
    %v472 = vunpack.c.l.b16 %v440
    %v473 = vunpack.c.l.b16 %v441
    %v474 = vunpack.c.l.b16 %v442
    %v475 = vunpack.c.l.b16 %v443
    %v476 = vunpack.c.l.b16 %v444
    %v477 = vunpack.c.l.b16 %v445
    %v478 = vpack.c.b16 %v463, %v462
    %v479 = vpack.c.b16 %v465, %v464
    %v480 = vpack.c.b16 %v467, %v466
    %v481 = vpack.c.b16 %v469, %v468
    %v482 = vpack.c.b16 %v471, %v470
    %v483 = vpack.c.b16 %v473, %v472
    %v484 = vpack.c.b16 %v475, %v474
    %v485 = vpack.c.b16 %v477, %v476
    %494 = vmatprep.subr.bf16.mxu0 0
    %495 = vmatpush1.bf16.xpose.msra.mxu0 %v478
    %496 = vmatprep.subr.bf16.mxu0 0
    %497 = vmatpush1.bf16.xpose.msra.mxu0 %v479
    %498 = vmatprep.subr.bf16.mxu0 0
    %499 = vmatpush1.bf16.xpose.msra.mxu0 %v480
    %500 = vmatprep.subr.bf16.mxu0 0
    %501 = vmatpush1.bf16.xpose.msra.mxu0 %v481
    %502 = vmatprep.subr.bf16.mxu0 0
    %503 = vmatpush1.bf16.xpose.msra.mxu0 %v482
    %504 = vmatprep.subr.bf16.mxu0 0
    %505 = vmatpush1.bf16.xpose.msra.mxu0 %v483
    %506 = vmatprep.subr.bf16.mxu0 0
    %507 = vmatpush1.bf16.xpose.msra.mxu0 %v484
    %508 = vmatprep.subr.bf16.mxu0 0
    %509 = vmatpush1.bf16.xpose.msra.mxu0 %v485
    %510 = vmatprep.subr.bf16.mxu0 0
    %511 = vmatpush1.bf16.xpose.msra.mxu0 0
    %512 = vmatprep.subr.bf16.mxu0 0
    %513 = vmatpush1.bf16.xpose.msra.mxu0 0
    %514 = vmatprep.subr.bf16.mxu0 0
    %515 = vmatpush1.bf16.xpose.msra.mxu0 0
    %516 = vmatprep.subr.bf16.mxu0 0
    %517 = vmatpush1.bf16.xpose.msra.mxu0 0
    %518 = vmatprep.subr.bf16.mxu0 0
    %519 = vmatpush1.bf16.xpose.msra.mxu0 0
    %520 = vmatprep.subr.bf16.mxu0 0
    %521 = vmatpush1.bf16.xpose.msra.mxu0 0
    %522 = vmatprep.subr.bf16.mxu0 0
    %523 = vmatpush1.bf16.xpose.msra.mxu0 0
    %524 = vmatprep.subr.bf16.mxu0 0
    %525 = vmatpush1.bf16.xpose.msra.mxu0 0
    %526 = vmatprep.mubr.bf16.mxu0 0
    %527 = vmatmul.mubr.bf16.gmra.mrb[0].mxu0 %v429
    %v528 = vpop.f32.mrb[0].mxu0
    %v529 = vadd.f32 0.0, %v528
    %v530 = vpop.f32.mrb[0].mxu0
    %v531 = vpop.f32.mrb[0].mxu0
    %v532 = vpop.f32.mrb[0].mxu0
    %533 = vdwg.mxu0
    %534 = vst [vmem:[#allocation10 + $0x20] sm:$0xff] %v529
    %v535 = vld [vmem:[%s6] sm:$0xf]
    %v536 = vld [vmem:[#allocation7] sm:$0xf]
    %v537 = vld [vmem:[#allocation7 + $0x4] sm:$0xf]
    %v538 = vld [vmem:[#allocation7 + $0x8] sm:$0xf]
    %v539 = vld [vmem:[#allocation7 + $0xc] sm:$0xf]
    %v540 = vld [vmem:[#allocation7 + $0x10] sm:$0xf]
    %v541 = vld [vmem:[#allocation7 + $0x14] sm:$0xf]
    %v542 = vld [vmem:[#allocation7 + $0x18] sm:$0xf]
    %v543 = vld [vmem:[#allocation7 + $0x1c] sm:$0xf]
    %v544 = vld [vmem:[#allocation7 + $0x20] sm:$0xf]
    %v545 = vld [vmem:[#allocation7 + $0x24] sm:$0xf]
    %v546 = vld [vmem:[#allocation7 + $0x28] sm:$0xf]
    %v547 = vld [vmem:[#allocation7 + $0x2c] sm:$0xf]
    %v548 = vld [vmem:[#allocation7 + $0x30] sm:$0xf]
    %v549 = vld [vmem:[#allocation7 + $0x34] sm:$0xf]
    %v550 = vld [vmem:[#allocation7 + $0x38] sm:$0xf]
    %v551 = vld [vmem:[#allocation7 + $0x3c] sm:$0xf]
    %v568 = vunpack.c.l.b16 %v536
    %v569 = vunpack.c.l.b16 %v537
    %v570 = vunpack.c.l.b16 %v538
    %v571 = vunpack.c.l.b16 %v539
    %v572 = vunpack.c.l.b16 %v540
    %v573 = vunpack.c.l.b16 %v541
    %v574 = vunpack.c.l.b16 %v542
    %v575 = vunpack.c.l.b16 %v543
    %v576 = vunpack.c.l.b16 %v544
    %v577 = vunpack.c.l.b16 %v545
    %v578 = vunpack.c.l.b16 %v546
    %v579 = vunpack.c.l.b16 %v547
    %v580 = vunpack.c.l.b16 %v548
    %v581 = vunpack.c.l.b16 %v549
    %v582 = vunpack.c.l.b16 %v550
    %v583 = vunpack.c.l.b16 %v551
    %v584 = vpack.c.b16 %v569, %v568
    %v585 = vpack.c.b16 %v571, %v570
    %v586 = vpack.c.b16 %v573, %v572
    %v587 = vpack.c.b16 %v575, %v574
    %v588 = vpack.c.b16 %v577, %v576
    %v589 = vpack.c.b16 %v579, %v578
    %v590 = vpack.c.b16 %v581, %v580
    %v591 = vpack.c.b16 %v583, %v582
    %600 = vmatprep.subr.bf16.mxu0 0
    %601 = vmatpush1.bf16.xpose.msra.mxu0 %v584
    %602 = vmatprep.subr.bf16.mxu0 0
    %603 = vmatpush1.bf16.xpose.msra.mxu0 %v585
    %604 = vmatprep.subr.bf16.mxu0 0
    %605 = vmatpush1.bf16.xpose.msra.mxu0 %v586
    %606 = vmatprep.subr.bf16.mxu0 0
    %607 = vmatpush1.bf16.xpose.msra.mxu0 %v587
    %608 = vmatprep.subr.bf16.mxu0 0
    %609 = vmatpush1.bf16.xpose.msra.mxu0 %v588
    %610 = vmatprep.subr.bf16.mxu0 0
    %611 = vmatpush1.bf16.xpose.msra.mxu0 %v589
    %612 = vmatprep.subr.bf16.mxu0 0
    %613 = vmatpush1.bf16.xpose.msra.mxu0 %v590
    %614 = vmatprep.subr.bf16.mxu0 0
    %615 = vmatpush1.bf16.xpose.msra.mxu0 %v591
    %616 = vmatprep.subr.bf16.mxu0 0
    %617 = vmatpush1.bf16.xpose.msra.mxu0 0
    %618 = vmatprep.subr.bf16.mxu0 0
    %619 = vmatpush1.bf16.xpose.msra.mxu0 0
    %620 = vmatprep.subr.bf16.mxu0 0
    %621 = vmatpush1.bf16.xpose.msra.mxu0 0
    %622 = vmatprep.subr.bf16.mxu0 0
    %623 = vmatpush1.bf16.xpose.msra.mxu0 0
    %624 = vmatprep.subr.bf16.mxu0 0
    %625 = vmatpush1.bf16.xpose.msra.mxu0 0
    %626 = vmatprep.subr.bf16.mxu0 0
    %627 = vmatpush1.bf16.xpose.msra.mxu0 0
    %628 = vmatprep.subr.bf16.mxu0 0
    %629 = vmatpush1.bf16.xpose.msra.mxu0 0
    %630 = vmatprep.subr.bf16.mxu0 0
    %631 = vmatpush1.bf16.xpose.msra.mxu0 0
    %632 = vmatprep.mubr.bf16.mxu0 0
    %633 = vmatmul.mubr.bf16.gmra.mrb[0].mxu0 %v535
    %v634 = vpop.f32.mrb[0].mxu0
    %v635 = vadd.f32 0.0, %v634
    %v636 = vpop.f32.mrb[0].mxu0
    %v637 = vpop.f32.mrb[0].mxu0
    %v638 = vpop.f32.mrb[0].mxu0
    %639 = vdwg.mxu0
    %640 = vst [vmem:[#allocation10 + $0x28] sm:$0xff] %v635
    %v641 = vld [vmem:[%s7] sm:$0xf]
    %v642 = vld [vmem:[#allocation8] sm:$0xf]
    %v643 = vld [vmem:[#allocation8 + $0x4] sm:$0xf]
    %v644 = vld [vmem:[#allocation8 + $0x8] sm:$0xf]
    %v645 = vld [vmem:[#allocation8 + $0xc] sm:$0xf]
    %v646 = vld [vmem:[#allocation8 + $0x10] sm:$0xf]
    %v647 = vld [vmem:[#allocation8 + $0x14] sm:$0xf]
    %v648 = vld [vmem:[#allocation8 + $0x18] sm:$0xf]
    %v649 = vld [vmem:[#allocation8 + $0x1c] sm:$0xf]
    %v650 = vld [vmem:[#allocation8 + $0x20] sm:$0xf]
    %v651 = vld [vmem:[#allocation8 + $0x24] sm:$0xf]
    %v652 = vld [vmem:[#allocation8 + $0x28] sm:$0xf]
    %v653 = vld [vmem:[#allocation8 + $0x2c] sm:$0xf]
    %v654 = vld [vmem:[#allocation8 + $0x30] sm:$0xf]
    %v655 = vld [vmem:[#allocation8 + $0x34] sm:$0xf]
    %v656 = vld [vmem:[#allocation8 + $0x38] sm:$0xf]
    %v657 = vld [vmem:[#allocation8 + $0x3c] sm:$0xf]
    %v674 = vunpack.c.l.b16 %v642
    %v675 = vunpack.c.l.b16 %v643
    %v676 = vunpack.c.l.b16 %v644
    %v677 = vunpack.c.l.b16 %v645
    %v678 = vunpack.c.l.b16 %v646
    %v679 = vunpack.c.l.b16 %v647
    %v680 = vunpack.c.l.b16 %v648
    %v681 = vunpack.c.l.b16 %v649
    %v682 = vunpack.c.l.b16 %v650
    %v683 = vunpack.c.l.b16 %v651
    %v684 = vunpack.c.l.b16 %v652
    %v685 = vunpack.c.l.b16 %v653
    %v686 = vunpack.c.l.b16 %v654
    %v687 = vunpack.c.l.b16 %v655
    %v688 = vunpack.c.l.b16 %v656
    %v689 = vunpack.c.l.b16 %v657
    %v690 = vpack.c.b16 %v675, %v674
    %v691 = vpack.c.b16 %v677, %v676
    %v692 = vpack.c.b16 %v679, %v678
    %v693 = vpack.c.b16 %v681, %v680
    %v694 = vpack.c.b16 %v683, %v682
    %v695 = vpack.c.b16 %v685, %v684
    %v696 = vpack.c.b16 %v687, %v686
    %v697 = vpack.c.b16 %v689, %v688
    %706 = vmatprep.subr.bf16.mxu0 0
    %707 = vmatpush1.bf16.xpose.msra.mxu0 %v690
    %708 = vmatprep.subr.bf16.mxu0 0
    %709 = vmatpush1.bf16.xpose.msra.mxu0 %v691
    %710 = vmatprep.subr.bf16.mxu0 0
    %711 = vmatpush1.bf16.xpose.msra.mxu0 %v692
    %712 = vmatprep.subr.bf16.mxu0 0
    %713 = vmatpush1.bf16.xpose.msra.mxu0 %v693
    %714 = vmatprep.subr.bf16.mxu0 0
    %715 = vmatpush1.bf16.xpose.msra.mxu0 %v694
    %716 = vmatprep.subr.bf16.mxu0 0
    %717 = vmatpush1.bf16.xpose.msra.mxu0 %v695
    %718 = vmatprep.subr.bf16.mxu0 0
    %719 = vmatpush1.bf16.xpose.msra.mxu0 %v696
    %720 = vmatprep.subr.bf16.mxu0 0
    %721 = vmatpush1.bf16.xpose.msra.mxu0 %v697
    %722 = vmatprep.subr.bf16.mxu0 0
    %723 = vmatpush1.bf16.xpose.msra.mxu0 0
    %724 = vmatprep.subr.bf16.mxu0 0
    %725 = vmatpush1.bf16.xpose.msra.mxu0 0
    %726 = vmatprep.subr.bf16.mxu0 0
    %727 = vmatpush1.bf16.xpose.msra.mxu0 0
    %728 = vmatprep.subr.bf16.mxu0 0
    %729 = vmatpush1.bf16.xpose.msra.mxu0 0
    %730 = vmatprep.subr.bf16.mxu0 0
    %731 = vmatpush1.bf16.xpose.msra.mxu0 0
    %732 = vmatprep.subr.bf16.mxu0 0
    %733 = vmatpush1.bf16.xpose.msra.mxu0 0
    %734 = vmatprep.subr.bf16.mxu0 0
    %735 = vmatpush1.bf16.xpose.msra.mxu0 0
    %736 = vmatprep.subr.bf16.mxu0 0
    %737 = vmatpush1.bf16.xpose.msra.mxu0 0
    %738 = vmatprep.mubr.bf16.mxu0 0
    %739 = vmatmul.mubr.bf16.gmra.mrb[0].mxu0 %v641
    %v740 = vpop.f32.mrb[0].mxu0
    %v741 = vadd.f32 0.0, %v740
    %v742 = vpop.f32.mrb[0].mxu0
    %v743 = vpop.f32.mrb[0].mxu0
    %v744 = vpop.f32.mrb[0].mxu0
    %745 = vdwg.mxu0
    %746 = vst [vmem:[#allocation10 + $0x30] sm:$0xff] %v741
    // Predicated region
    $region50: #{tpu_custom_call.1} parent=1 // pred_check
      _
    $region51: #{tpu_custom_call.1} parent=1 // pred_check_branch
      %748 = sbr.rel (0) target = $region53
    $region52: #{tpu_custom_call.1} parent=1 // pred_region
      %s750 = ssub.s32 896, 896
      %751 = vsyncadd [#allocation4], %s750
      %s753 = sshll.u32 [#allocation10], 4
      %s754 = int_to_ptr.vmem [resolvable:$true] %s753
      %756 = dma.vmem_to_hbm [thread:$0]  %s754, 896, %s8, [#allocation4]
    $region53: #{tpu_custom_call.1} parent=1 // pred_fallthru
      _
    // Predicated region
    $region54: #{tpu_custom_call.1} parent=1 // pred_check
      _
    $region55: #{tpu_custom_call.1} parent=1 // pred_check_branch
      %758 = sbr.rel (0) target = $region57
    $region56: #{tpu_custom_call.1} parent=1 // pred_region
      %759 = dma.done [#allocation4], 896
    $region57: #{tpu_custom_call.1} parent=1 // pred_fallthru
      _
    %760 = vsyncpa [#allocation3], 1
    %761 = vsyncpa [#allocation6], 1
    %762 = vsyncpa [#allocation9], 1
    %763 = vsyncpa [#allocation4], 1

</llo_original>
